<compile_context>
chip_gen: v6e
topology: v6e:2x2x1
jax: 0.10.0
libtpu: 0.0.40
codegen_flags: <defaults>
</compile_context>

<pallas_src>
import functools

import jax
import jax.numpy as jnp
from jax.experimental import pallas as pl
from jax.experimental.pallas import tpu as pltpu


def _round_up(n: int, m: int) -> int:
    return ((n + m - 1) // m) * m


def linear_kernel(x_ref, w_ref, b_ref, o_ref, acc_ref):
    """One (tm, tn) output tile, accumulated over the K grid axis."""
    k = pl.program_id(2)

    @pl.when(k == 0)
    def _init():
        # Fold the bias into the accumulator init: one broadcast per output
        # tile, instead of a separate post-matmul VPU pass.
        acc_ref[...] = jnp.broadcast_to(
            b_ref[...].astype(jnp.float32), acc_ref.shape
        )

    # MXU matmul on lane-major operands (no transpose in-kernel).
    acc_ref[...] += jnp.dot(
        x_ref[...], w_ref[...], preferred_element_type=jnp.float32
    )

    @pl.when(k == pl.num_programs(2) - 1)
    def _store():
        o_ref[...] = acc_ref[...].astype(o_ref.dtype)


def simple_nn_forward(x, weight, bias, *, tm=256, tn=256, tk=512,
                      compute_dtype=None):
    """y = x @ weight.T + bias (torch.nn.Linear semantics) via Pallas.

    x:      (B, IN)
    weight: (OUT, IN)   -- PyTorch nn.Linear layout
    bias:   (OUT,)
    """
    B, IN = x.shape
    OUT, IN_w = weight.shape
    assert IN == IN_w, "weight/input size mismatch"
    out_dtype = x.dtype

    # Optional low-precision operands (f32 accumulation preserved in-kernel).
    if compute_dtype is not None:
        x = x.astype(compute_dtype)
        weight = weight.astype(compute_dtype)

    # Pre-transpose the weight once (it's a parameter; this is free at runtime
    # relative to doing it inside every kernel invocation).
    w_t = weight.T  # (IN, OUT)

    # Lane-dense padding: OUT/IN -> multiples of 128 (lanes), B -> multiple of 8
    # (sublanes). Compute on the padded slab, slice afterwards.
    B_pad = _round_up(B, 8)
    IN_pad = _round_up(IN, 128)
    OUT_pad = _round_up(OUT, 128)

    # Clamp tile sizes to the (padded) problem, then make tiles divide evenly.
    tm = min(tm, B_pad)
    tn = min(tn, OUT_pad)
    tk = min(tk, IN_pad)
    B_pad = _round_up(B_pad, tm)
    IN_pad = _round_up(IN_pad, tk)
    OUT_pad = _round_up(OUT_pad, tn)

    x_p = jnp.pad(x, ((0, B_pad - B), (0, IN_pad - IN)))
    w_p = jnp.pad(w_t, ((0, IN_pad - IN), (0, OUT_pad - OUT)))
    b_p = jnp.pad(bias.reshape(1, OUT), ((0, 0), (0, OUT_pad - OUT)))

    grid = (B_pad // tm, OUT_pad // tn, IN_pad // tk)

    out_padded = pl.pallas_call(
        linear_kernel,
        out_shape=jax.ShapeDtypeStruct((B_pad, OUT_pad), out_dtype),
        grid_spec=pltpu.PrefetchScalarGridSpec(
            num_scalar_prefetch=0,
            grid=grid,
            in_specs=[
                pl.BlockSpec((tm, tk), lambda i, j, k: (i, k)),   # x tile
                pl.BlockSpec((tk, tn), lambda i, j, k: (k, j)),   # W^T tile
                pl.BlockSpec((1, tn), lambda i, j, k: (0, j)),    # bias tile
            ],
            out_specs=pl.BlockSpec((tm, tn), lambda i, j, k: (i, j)),
            scratch_shapes=[pltpu.VMEM((tm, tn), jnp.float32)],
        ),
        compiler_params=pltpu.CompilerParams(
            dimension_semantics=("parallel", "parallel", "arbitrary"),
        ),
    )(x_p, w_p, b_p)

    return out_padded[:B, :OUT]


if __name__ == "__main__":
    # Small shapes consistent with the module: SimpleNN(input_size=32, output_size=16)
    batch = 8
    input_size = 32
    output_size = 16

    key = jax.random.PRNGKey(0)
    kx, kw, kb = jax.random.split(key, 3)

    x = jax.random.normal(kx, (batch, input_size), dtype=jnp.float32)
    # Deterministic parameter init (mimics nn.Linear's uniform(-1/sqrt(in), 1/sqrt(in)))
    bound = 1.0 / jnp.sqrt(jnp.float32(input_size))
    weight = jax.random.uniform(kw, (output_size, input_size),
                                minval=-bound, maxval=bound, dtype=jnp.float32)
    bias = jax.random.uniform(kb, (output_size,),
                              minval=-bound, maxval=bound, dtype=jnp.float32)

    fwd = jax.jit(functools.partial(simple_nn_forward))
    y = fwd(x, weight, bias)
    jax.block_until_ready(y)

    # Reference check in plain JAX (f32 end-to-end for the demo shapes).
    y_ref = x @ weight.T + bias
    assert y.shape == (batch, output_size)
    assert jnp.allclose(y, y_ref, atol=1e-5, rtol=1e-5)

    print("KERNEL_OK")
</pallas_src>

<mosaic_0001>
module attributes {stable_mosaic.version = 11 : i64} {
  func.func @linear_kernel(%arg0: i32, %arg1: i32, %arg2: i32, %arg3: memref<8x128xf32, #tpu.memory_space<vmem>>, %arg4: memref<128x128xf32, #tpu.memory_space<vmem>>, %arg5: memref<1x128xf32, #tpu.memory_space<vmem>>, %arg6: memref<8x128xf32, #tpu.memory_space<vmem>>, %arg7: memref<8x128xf32, #tpu.memory_space<vmem>>) attributes {dimension_semantics = [#tpu.dimension_semantics<parallel>, #tpu.dimension_semantics<parallel>, #tpu.dimension_semantics<arbitrary>], iteration_bounds = array<i64: 1, 1, 1>, scalar_prefetch = 0 : i64, scratch_operands = 1 : i64, tpu.core_type = #tpu.core_type<tc>, window_params = [{transform_indices = @transform_0, window_bounds = array<i64: 8, 128>}, {transform_indices = @transform_1, window_bounds = array<i64: 128, 128>}, {transform_indices = @transform_2, window_bounds = array<i64: 1, 128>}, {transform_indices = @transform_3, window_bounds = array<i64: 8, 128>}]} {
    %c0_i32 = arith.constant 0 : i32
    %0 = arith.cmpi eq, %arg2, %c0_i32 : i32
    %1 = arith.extui %0 : i1 to i32
    %c0_i32_0 = arith.constant 0 : i32
    %2 = arith.cmpi ne, %1, %c0_i32_0 : i32
    scf.if %2 {
      %c0_10 = arith.constant 0 : index
      %c0_11 = arith.constant 0 : index
      %12 = vector.load %arg5[%c0_10, %c0_11] : memref<1x128xf32, #tpu.memory_space<vmem>>, vector<1x128xf32>
      %13 = vector.shape_cast %12 : vector<1x128xf32> to vector<1x128xf32>
      %14 = vector.broadcast %13 : vector<1x128xf32> to vector<8x128xf32>
      %c0_12 = arith.constant 0 : index
      %c0_13 = arith.constant 0 : index
      %15 = vector.load %arg7[%c0_12, %c0_13] : memref<8x128xf32, #tpu.memory_space<vmem>>, vector<8x128xf32>
      tpu.vector_store %arg7[%c0_12, %c0_13], %14 {strides = array<i32>} : memref<8x128xf32, #tpu.memory_space<vmem>>, vector<8x128xf32>,
    } else {
    }
    %c0 = arith.constant 0 : index
    %c0_1 = arith.constant 0 : index
    %3 = vector.load %arg7[%c0, %c0_1] : memref<8x128xf32, #tpu.memory_space<vmem>>, vector<8x128xf32>
    %c0_2 = arith.constant 0 : index
    %c0_3 = arith.constant 0 : index
    %4 = vector.load %arg3[%c0_2, %c0_3] : memref<8x128xf32, #tpu.memory_space<vmem>>, vector<8x128xf32>
    %c0_4 = arith.constant 0 : index
    %c0_5 = arith.constant 0 : index
    %5 = vector.load %arg4[%c0_4, %c0_5] : memref<128x128xf32, #tpu.memory_space<vmem>>, vector<128x128xf32>
    %cst = arith.constant dense<0.000000e+00> : vector<8x128xf32>
    %6 = tpu.matmul %4, %5, %cst {dimension_numbers = #tpu.dot_dimension_numbers<[1], [0], [0], [1], [0, 0, 1, 1], [], []>} : vector<8x128xf32>, vector<128x128xf32>, vector<8x128xf32> -> vector<8x128xf32>
    %7 = arith.addf %3, %6 : vector<8x128xf32>
    %c0_6 = arith.constant 0 : index
    %c0_7 = arith.constant 0 : index
    %8 = vector.load %arg7[%c0_6, %c0_7] : memref<8x128xf32, #tpu.memory_space<vmem>>, vector<8x128xf32>
    tpu.vector_store %arg7[%c0_6, %c0_7], %7 {strides = array<i32>} : memref<8x128xf32, #tpu.memory_space<vmem>>, vector<8x128xf32>,
    %c0_i32_8 = arith.constant 0 : i32
    %9 = arith.cmpi eq, %arg2, %c0_i32_8 : i32
    %10 = arith.extui %9 : i1 to i32
    %c0_i32_9 = arith.constant 0 : i32
    %11 = arith.cmpi ne, %10, %c0_i32_9 : i32
    scf.if %11 {
      %c0_10 = arith.constant 0 : index
      %c0_11 = arith.constant 0 : index
      %12 = vector.load %arg7[%c0_10, %c0_11] : memref<8x128xf32, #tpu.memory_space<vmem>>, vector<8x128xf32>
      %c0_12 = arith.constant 0 : index
      %c0_13 = arith.constant 0 : index
      %13 = vector.load %arg6[%c0_12, %c0_13] : memref<8x128xf32, #tpu.memory_space<vmem>>, vector<8x128xf32>
      tpu.vector_store %arg6[%c0_12, %c0_13], %12 {strides = array<i32>} : memref<8x128xf32, #tpu.memory_space<vmem>>, vector<8x128xf32>,
    } else {
    }
    return
  }
  func.func @transform_0(%arg0: i32, %arg1: i32, %arg2: i32) -> (i32, i32) {
    %c0_i32 = arith.constant 0 : i32
    return %arg0, %arg2 : i32, i32
  }
  func.func @transform_1(%arg0: i32, %arg1: i32, %arg2: i32) -> (i32, i32) {
    %c0_i32 = arith.constant 0 : i32
    return %arg2, %arg1 : i32, i32
  }
  func.func @transform_2(%arg0: i32, %arg1: i32, %arg2: i32) -> (i32, i32) {
    %c0_i32 = arith.constant 0 : i32
    %c0_i32_0 = arith.constant 0 : i32
    return %c0_i32, %arg1 : i32, i32
  }
  func.func @transform_3(%arg0: i32, %arg1: i32, %arg2: i32) -> (i32, i32) {
    %c0_i32 = arith.constant 0 : i32
    return %arg0, %arg1 : i32, i32
  }
}

</mosaic_0001>

<llo_original>
// kernel: simple_nn_forward.1
$region0: #{simple_nn_forward.1}
  #allocation0 [shape = 'u32[]', space=smem, size = 0x4, offset = 0x4, fixed_abs, tag = 'smem constant byte address 0x4 - core index']
  #allocation1 [shape = 'u32[144,128]{1,0:T(1,128)}', space=vmem, size = 0x12000, scoped, tag = 'internal scratch']
  #allocation2 [shape = 'f32[8,128]{1,0:T(8,128)}', space=vmem, size = 0x1000, scoped, tag = 'scratch operand']
  %s0 = inlined_call_operand.vmem [shape: f32[8,128], index: 0, kind: input, shape index: {}]
  %s1 = inlined_call_operand.vmem [shape: f32[128,128], index: 1, kind: input, shape index: {}]
  %s2 = inlined_call_operand.vmem [shape: f32[1,128], index: 2, kind: input, shape index: {}]
  %s3 = inlined_call_operand.hbm [shape: f32[8,128], index: 3, kind: output, shape index: {}]
  %s4 = sld [smem:[#allocation0]]
  $region30: #{simple_nn_forward.1} parent=0
    _
  %s6 = ssub.s32 1, %s4
  %s7 = scalar_select 0, %s6, %s4
  $region1: #{simple_nn_forward.1} parent=0
    #allocation3 [shape = 'u8[4096]{0}', space=vmem, size = 0x1000, scoped, tag = 'output window, operand 0, single buffered']
    #allocation4 [shape = 's32[1]{0}', space=sflag, size = 0x4, scoped, tag = 'scoped memory for simple_nn_forward.1']
    %8 = vsyncpa [#allocation4], 0
    // Predicated region
    $region2: #{simple_nn_forward.1} parent=1 // pred_check
      _
    $region3: #{simple_nn_forward.1} parent=1 // pred_check_branch
      %10 = sbr.rel (0) target = $region5
    $region4: #{simple_nn_forward.1} parent=1 // pred_region
      _
    $region5: #{simple_nn_forward.1} parent=1 // pred_fallthru
      _
    // Predicated region
    $region6: #{simple_nn_forward.1} parent=1 // pred_check
      _
    $region7: #{simple_nn_forward.1} parent=1 // pred_check_branch
      %12 = sbr.rel (0) target = $region9
    $region8: #{simple_nn_forward.1} parent=1 // pred_region
      _
    $region9: #{simple_nn_forward.1} parent=1 // pred_fallthru
      _
    // Predicated region
    $region10: #{simple_nn_forward.1} parent=1 // pred_check
      _
    $region11: #{simple_nn_forward.1} parent=1 // pred_check_branch
      %14 = sbr.rel (0) target = $region13
    $region12: #{simple_nn_forward.1} parent=1 // pred_region
      _
    $region13: #{simple_nn_forward.1} parent=1 // pred_fallthru
      _
    %p15 = scmp.eq.s32.totalorder 0, 0
    // Predicated region
    $region14: #{simple_nn_forward.1} parent=1 // pred_check
      %p16 = pneg %p15
    $region15: #{simple_nn_forward.1} parent=1 // pred_check_branch
      %18 = sbr.rel (%p16) target = $region17
    $region16: #{simple_nn_forward.1} parent=1 // pred_region
      %v19 = vld [vmem:[%s2] sm:$0x1]
      %v21 = vlaneseq
      %v22 = vshrl.u32 %v21, 7
      %v23 = vsub.s32 0, %v22
      %v24 = vrot.slane %v19, %v23
      %26 = vst [vmem:[#allocation2] sm:$0xff] %v24
    $region17: #{simple_nn_forward.1} parent=1 // pred_fallthru
      _
    %v27 = vld [vmem:[#allocation2] sm:$0xff]
    %v28 = vld [vmem:[%s0] sm:$0xff]
    %v29 = vld [vmem:[%s1] sm:$0xff]
    %v30 = vld [vmem:[%s1 + $0x8] sm:$0xff]
    %v31 = vld [vmem:[%s1 + $0x10] sm:$0xff]
    %v32 = vld [vmem:[%s1 + $0x18] sm:$0xff]
    %v33 = vld [vmem:[%s1 + $0x20] sm:$0xff]
    %v34 = vld [vmem:[%s1 + $0x28] sm:$0xff]
    %v35 = vld [vmem:[%s1 + $0x30] sm:$0xff]
    %v36 = vld [vmem:[%s1 + $0x38] sm:$0xff]
    %v37 = vld [vmem:[%s1 + $0x40] sm:$0xff]
    %v38 = vld [vmem:[%s1 + $0x48] sm:$0xff]
    %v39 = vld [vmem:[%s1 + $0x50] sm:$0xff]
    %v40 = vld [vmem:[%s1 + $0x58] sm:$0xff]
    %v41 = vld [vmem:[%s1 + $0x60] sm:$0xff]
    %v42 = vld [vmem:[%s1 + $0x68] sm:$0xff]
    %v43 = vld [vmem:[%s1 + $0x70] sm:$0xff]
    %v44 = vld [vmem:[%s1 + $0x78] sm:$0xff]
    %45 = vmatprep.subr.mxu0 0.0
    %46 = vmatpush1.msra.mxu0 %v44
    %47 = vmatprep.subr.mxu0 0.0
    %48 = vmatpush1.msra.mxu0 %v43
    %49 = vmatprep.subr.mxu0 0.0
    %50 = vmatpush1.msra.mxu0 %v42
    %51 = vmatprep.subr.mxu0 0.0
    %52 = vmatpush1.msra.mxu0 %v41
    %53 = vmatprep.subr.mxu0 0.0
    %54 = vmatpush1.msra.mxu0 %v40
    %55 = vmatprep.subr.mxu0 0.0
    %56 = vmatpush1.msra.mxu0 %v39
    %57 = vmatprep.subr.mxu0 0.0
    %58 = vmatpush1.msra.mxu0 %v38
    %59 = vmatprep.subr.mxu0 0.0
    %60 = vmatpush1.msra.mxu0 %v37
    %61 = vmatprep.subr.mxu0 0.0
    %62 = vmatpush1.msra.mxu0 %v36
    %63 = vmatprep.subr.mxu0 0.0
    %64 = vmatpush1.msra.mxu0 %v35
    %65 = vmatprep.subr.mxu0 0.0
    %66 = vmatpush1.msra.mxu0 %v34
    %67 = vmatprep.subr.mxu0 0.0
    %68 = vmatpush1.msra.mxu0 %v33
    %69 = vmatprep.subr.mxu0 0.0
    %70 = vmatpush1.msra.mxu0 %v32
    %71 = vmatprep.subr.mxu0 0.0
    %72 = vmatpush1.msra.mxu0 %v31
    %73 = vmatprep.subr.mxu0 0.0
    %74 = vmatpush1.msra.mxu0 %v30
    %75 = vmatprep.subr.mxu0 0.0
    %76 = vmatpush1.msra.mxu0 %v29
    %77 = vmatprep.subr.mxu0 0.0
    %78 = vmatpush2.msra.mxu0 0.0
    %79 = vmatprep.subr.mxu0 0.0
    %80 = vmatpush2.msra.mxu0 0.0
    %81 = vmatprep.subr.mxu0 0.0
    %82 = vmatpush2.msra.mxu0 0.0
    %83 = vmatprep.subr.mxu0 0.0
    %84 = vmatpush2.msra.mxu0 0.0
    %85 = vmatprep.subr.mxu0 0.0
    %86 = vmatpush2.msra.mxu0 0.0
    %87 = vmatprep.subr.mxu0 0.0
    %88 = vmatpush2.msra.mxu0 0.0
    %89 = vmatprep.subr.mxu0 0.0
    %90 = vmatpush2.msra.mxu0 0.0
    %91 = vmatprep.subr.mxu0 0.0
    %92 = vmatpush2.msra.mxu0 0.0
    %93 = vmatprep.subr.mxu0 0.0
    %94 = vmatpush2.msra.mxu0 0.0
    %95 = vmatprep.subr.mxu0 0.0
    %96 = vmatpush2.msra.mxu0 0.0
    %97 = vmatprep.subr.mxu0 0.0
    %98 = vmatpush2.msra.mxu0 0.0
    %99 = vmatprep.subr.mxu0 0.0
    %100 = vmatpush2.msra.mxu0 0.0
    %101 = vmatprep.subr.mxu0 0.0
    %102 = vmatpush2.msra.mxu0 0.0
    %103 = vmatprep.subr.mxu0 0.0
    %104 = vmatpush2.msra.mxu0 0.0
    %105 = vmatprep.subr.mxu0 0.0
    %106 = vmatpush2.msra.mxu0 0.0
    %107 = vmatprep.subr.mxu0 0.0
    %108 = vmatpush2.msra.mxu0 0.0
    %109 = vmatprep.mubr.f32.mxu0 0.0
    %110 = vmatmul.mubr.f32.gmra.mxu0 %v28
    %v111 = vpop.f32.mrf.mxu0
    %v112 = vadd.f32 0.0, %v111
    %v113 = vpop.f32.mrf.mxu0
    %114 = vdwg.mxu0
    %v115 = vadd.f32 %v27, %v112
    %116 = vst [vmem:[#allocation2] sm:$0xff] %v115
    // Predicated region
    $region18: #{simple_nn_forward.1} parent=1 // pred_check
      %p117 = pneg %p15
    $region19: #{simple_nn_forward.1} parent=1 // pred_check_branch
      %119 = sbr.rel (%p117) target = $region21
    $region20: #{simple_nn_forward.1} parent=1 // pred_region
      %v120 = vld [vmem:[#allocation2] sm:$0xff]
      %121 = vst [vmem:[#allocation3] sm:$0xff] %v120
    $region21: #{simple_nn_forward.1} parent=1 // pred_fallthru
      _
    // Predicated region
    $region22: #{simple_nn_forward.1} parent=1 // pred_check
      _
    $region23: #{simple_nn_forward.1} parent=1 // pred_check_branch
      %123 = sbr.rel (0) target = $region25
    $region24: #{simple_nn_forward.1} parent=1 // pred_region
      %s125 = ssub.s32 128, 128
      %126 = vsyncadd [#allocation4], %s125
      %s128 = sshll.u32 [#allocation3], 4
      %s129 = int_to_ptr.vmem [resolvable:$true] %s128
      %131 = dma.vmem_to_hbm [thread:$0]  %s129, 128, %s3, [#allocation4]
    $region25: #{simple_nn_forward.1} parent=1 // pred_fallthru
      _
    // Predicated region
    $region26: #{simple_nn_forward.1} parent=1 // pred_check
      _
    $region27: #{simple_nn_forward.1} parent=1 // pred_check_branch
      %133 = sbr.rel (0) target = $region29
    $region28: #{simple_nn_forward.1} parent=1 // pred_region
      %134 = dma.done [#allocation4], 128
    $region29: #{simple_nn_forward.1} parent=1 // pred_fallthru
      _
    %135 = vsyncpa [#allocation4], 1

</llo_original>
